<compile_context>
chip_gen: v7x
topology: tpu7x:2x2x1
jax: 0.10.0
libtpu: 0.0.40
codegen_flags: <defaults>
</compile_context>

<pallas_src>
import math
import functools

import jax
import jax.numpy as jnp
from jax.experimental import pallas as pl
from jax.experimental.pallas import tpu as pltpu

EPS = 1e-5  # torch.nn.LayerNorm default


# ---------------------------------------------------------------------------
# Kernel 1: LayerNorm(Z) + pair-bias projection, emitted head-major and
#           flattened as (B, n_head, N*N) bf16 (lane-dense last dim).
# ---------------------------------------------------------------------------
def _pair_bias_kernel(z_ref, gz_ref, bz_ref, wb_ref, o_ref):
    z = z_ref[0]                                             # (r_tile, N, d_pair) f32
    r_tile, n_res, d_pair = z.shape
    mu = jnp.mean(z, axis=-1, keepdims=True)
    var = jnp.mean(jnp.square(z - mu), axis=-1, keepdims=True)
    zn = (z - mu) * jax.lax.rsqrt(var + EPS) * gz_ref[...] + bz_ref[...]
    zn = zn.reshape(r_tile * n_res, d_pair).astype(jnp.bfloat16)   # leading-dim merge only
    # One MXU call: (n_head, d_pair) x (r_tile*N, d_pair)^T -> (n_head, r_tile*N)
    b = jax.lax.dot_general(wb_ref[...], zn, (((1,), (1,)), ((), ())),
                            preferred_element_type=jnp.float32)
    o_ref[0] = b.astype(o_ref.dtype)                         # single lane-dense bf16 store


# ---------------------------------------------------------------------------
# Kernel 2: LayerNorm(M) + gated multi-head row attention with pair bias
#           + fused residual add.  s_tile MSA rows per grid step.
# ---------------------------------------------------------------------------
def _msa_row_attn_kernel(n_head, c, s_tile,
                         m_raw_ref, bias_ref, mask_ref,
                         gm_ref, bm_ref, wqkvg_ref, gb_ref, wo_ref, ob_ref,
                         o_ref, g_buf):
    hc = n_head * c
    n_res = m_raw_ref.shape[2]
    d_node = m_raw_ref.shape[3]
    rows = s_tile * n_res

    x = m_raw_ref[0].reshape(rows, d_node)                   # (rows, d_node) f32

    # LayerNorm over d_node (f32)
    mu = jnp.mean(x, axis=-1, keepdims=True)
    var = jnp.mean(jnp.square(x - mu), axis=-1, keepdims=True)
    m = (x - mu) * jax.lax.rsqrt(var + EPS) * gm_ref[...] + bm_ref[...]

    # Fused q|k|v|gate projection (1/sqrt(c) already folded into the Wq columns).
    qkvg = jnp.dot(m.astype(jnp.bfloat16), wqkvg_ref[...],
                   preferred_element_type=jnp.float32)       # (rows, 4*hc) f32

    gate = jax.nn.sigmoid(qkvg[:, 3 * hc:4 * hc] + gb_ref[...])   # (rows, hc) f32
    mask_bias = 1e9 * (mask_ref[0] - 1.0)                    # (s_tile, 1, N) f32, key dim

    # Per-head attention (single-batch-dim einsums; static unroll, n_head small).
    for h in range(n_head):
        qh = qkvg[:, h * c:(h + 1) * c].astype(jnp.bfloat16).reshape(s_tile, n_res, c)
        kh = qkvg[:, hc + h * c:hc + (h + 1) * c].astype(jnp.bfloat16).reshape(s_tile, n_res, c)
        vh = qkvg[:, 2 * hc + h * c:2 * hc + (h + 1) * c].astype(jnp.bfloat16).reshape(s_tile, n_res, c)

        logits = jnp.einsum('sqc,skc->sqk', qh, kh,
                            preferred_element_type=jnp.float32)     # (s_tile, N, N) f32
        logits = logits + bias_ref[0, h].astype(jnp.float32)[None] + mask_bias
        logits = logits - jnp.max(logits, axis=-1, keepdims=True)
        p = jnp.exp(logits)
        # Normalisation applied AFTER the PV matmul (folded into the small gate multiply)
        recip = pl.reciprocal(jnp.sum(p, axis=-1, keepdims=True), approx=True)  # (s,N,1)

        oh = jnp.einsum('sqk,skc->sqc', p.astype(jnp.bfloat16), vh,
                        preferred_element_type=jnp.float32)          # (s_tile, N, c) f32
        gate_h = gate[:, h * c:(h + 1) * c].reshape(s_tile, n_res, c)
        g_buf[:, h * c:(h + 1) * c] = (
            (oh * (gate_h * recip)).reshape(rows, c).astype(jnp.bfloat16))

    # ONE output-projection matmul with K = hc (full MXU depth), then residual + bias.
    out = jnp.dot(g_buf[...], wo_ref[...], preferred_element_type=jnp.float32)
    out = x + out + ob_ref[...]
    o_ref[0] = out.reshape(s_tile, n_res, d_node).astype(o_ref.dtype)


# ---------------------------------------------------------------------------
# Tile / VMEM heuristics
# ---------------------------------------------------------------------------
def _pick_r_tile(n_res, d_pair, budget_bytes=4 * 1024 * 1024):
    """Largest divisor r of N_res whose Z block fits the budget and whose flattened
    output tile (r*N lanes) is 128-aligned (or covers a full N*N row)."""
    for r in range(n_res, 0, -1):
        if n_res % r:
            continue
        if (r * n_res) % 128 != 0 and r != n_res:
            continue
        if r * n_res * d_pair * 4 <= budget_bytes:
            return r
    for r in range(1, n_res + 1):
        if n_res % r == 0 and ((r * n_res) % 128 == 0 or r == n_res):
            return r
    return n_res


def _kernel2_vmem_bytes(s_tile, n_res, d_node, hc, n_head):
    rows = s_tile * n_res
    b = 0
    b += 2 * (s_tile * n_res * d_node * 4) * 2       # M_raw block + output block, double-buffered
    b += n_head * n_res * n_res * 2 * 2              # pair-bias block (bf16, double-buffered)
    b += s_tile * n_res * 4 * 2                      # mask block
    b += (d_node * 4 * hc + hc * d_node) * 2 * 2     # weights (bf16, double-buffered)
    b += rows * 4 * hc * 4                           # qkvg (f32)
    b += rows * hc * 4                               # gate (f32)
    b += 3 * s_tile * n_res * n_res * 4              # per-head logits / p / exp (f32)
    b += rows * hc * 2                               # gated scratch (bf16)
    b += 2 * rows * d_node * 4                       # x / out (f32)
    return b


def _pick_s_tile(B, S, n_res, d_node, hc, n_head, budget_bytes=24 * 1024 * 1024):
    s_tile = 1
    for s in range(min(S, 8), 0, -1):
        if S % s == 0 and _kernel2_vmem_bytes(s, n_res, d_node, hc, n_head) <= budget_bytes:
            s_tile = s
            break
    # Keep at least 2 grid steps so both TensorCores of a 2-TC part get work.
    while B * (S // s_tile) < 2 and s_tile > 1:
        s_tile = next((s for s in range(s_tile - 1, 0, -1) if S % s == 0), 1)
    return s_tile


# ---------------------------------------------------------------------------
# Host-side (one-time) parameter fusion / casting -- hoisted out of the call path.
# ---------------------------------------------------------------------------
def prepare_params(params, *, c, n_head):
    d_node = params["wq"].shape[0]
    d_pair = params["w_b"].shape[1]
    hc = n_head * c
    scale = 1.0 / math.sqrt(c)
    wqkvg = jnp.concatenate(
        [params["wq"] * scale, params["wk"], params["wv"], params["wg"]], axis=1
    ).astype(jnp.bfloat16)                                   # (d_node, 4*hc), q pre-scaled
    return dict(
        ln_m_g=params["ln_m_g"].reshape(1, d_node).astype(jnp.float32),
        ln_m_b=params["ln_m_b"].reshape(1, d_node).astype(jnp.float32),
        ln_z_g=params["ln_z_g"].reshape(1, d_pair).astype(jnp.float32),
        ln_z_b=params["ln_z_b"].reshape(1, d_pair).astype(jnp.float32),
        w_b=params["w_b"].astype(jnp.bfloat16),
        wqkvg=wqkvg,
        gating_b=params["gating_b"].reshape(1, hc).astype(jnp.float32),
        wo=params["wo"].astype(jnp.bfloat16),
        out_b=params["out_b"].reshape(1, d_node).astype(jnp.float32),
    )


# ---------------------------------------------------------------------------
# Wrapper
# ---------------------------------------------------------------------------
def msa_row_attention_with_pair_bias(M_raw, Z, M_mask, prepared, *, c, n_head,
                                     single_buffer_bias=False):
    B, S, N, d_node = M_raw.shape
    d_pair = Z.shape[-1]
    hc = n_head * c

    # ---- kernel 1: pair bias -> (B, n_head, N*N) bf16; reshape outside is free ----
    r_tile = _pick_r_tile(N, d_pair)
    bias_flat = pl.pallas_call(
        _pair_bias_kernel,
        out_shape=jax.ShapeDtypeStruct((B, n_head, N * N), jnp.bfloat16),
        grid_spec=pltpu.PrefetchScalarGridSpec(
            num_scalar_prefetch=0,
            grid=(B, N // r_tile),
            in_specs=[
                pl.BlockSpec((1, r_tile, N, d_pair), lambda bb, i: (bb, i, 0, 0)),
                pl.BlockSpec((1, d_pair), lambda bb, i: (0, 0)),
                pl.BlockSpec((1, d_pair), lambda bb, i: (0, 0)),
                pl.BlockSpec((n_head, d_pair), lambda bb, i: (0, 0)),
            ],
            out_specs=pl.BlockSpec((1, n_head, r_tile * N), lambda bb, i: (bb, 0, i)),
        ),
        compiler_params=pltpu.CompilerParams(
            dimension_semantics=("parallel", "parallel")),
    )(Z, prepared["ln_z_g"], prepared["ln_z_b"], prepared["w_b"])
    bias = bias_flat.reshape(B, n_head, N, N)
    # TODO(synk): gather_async / gather_async_opp are multi-device comm ops; identity on 1 device.
    # TODO(synk): optionally feed Z as bf16 (upcast for LN stats) to halve kernel-1 HBM reads.

    # ---- kernel 2: fused LN + gated multi-head row attention + residual ----
    s_tile = _pick_s_tile(B, S, N, d_node, hc, n_head)
    rows = s_tile * N
    mask4 = M_mask.reshape(B, S, 1, N).astype(jnp.float32)

    bias_spec_kwargs = {}
    if single_buffer_bias:
        # For 64 MiB-VMEM parts (v7x): the bias block index is constant over the row
        # axis, so single-buffering halves its resident footprint at no HBM cost.
        bias_spec_kwargs["pipeline_mode"] = pl.Buffered(1)
    bias_spec = pl.BlockSpec((1, n_head, N, N), lambda bb, sb: (bb, 0, 0, 0),
                             **bias_spec_kwargs)

    vmem_limit = int(min(max(2 * _kernel2_vmem_bytes(s_tile, N, d_node, hc, n_head),
                             32 * 1024 * 1024), 64 * 1024 * 1024))

    kernel = functools.partial(_msa_row_attn_kernel, n_head, c, s_tile)
    out = pl.pallas_call(
        kernel,
        out_shape=jax.ShapeDtypeStruct((B, S, N, d_node), M_raw.dtype),
        grid_spec=pltpu.PrefetchScalarGridSpec(
            num_scalar_prefetch=0,
            grid=(B, S // s_tile),
            in_specs=[
                pl.BlockSpec((1, s_tile, N, d_node), lambda bb, sb: (bb, sb, 0, 0)),  # M_raw rows
                bias_spec,                                                            # pair bias (resident over sb)
                pl.BlockSpec((1, s_tile, 1, N), lambda bb, sb: (bb, sb, 0, 0)),       # mask rows
                pl.BlockSpec((1, d_node), lambda bb, sb: (0, 0)),                     # ln_m gamma
                pl.BlockSpec((1, d_node), lambda bb, sb: (0, 0)),                     # ln_m beta
                pl.BlockSpec((d_node, 4 * hc), lambda bb, sb: (0, 0)),                # fused Wq|Wk|Wv|Wg
                pl.BlockSpec((1, hc), lambda bb, sb: (0, 0)),                         # gating bias
                pl.BlockSpec((hc, d_node), lambda bb, sb: (0, 0)),                    # Wo
                pl.BlockSpec((1, d_node), lambda bb, sb: (0, 0)),                     # out_bias
            ],
            out_specs=pl.BlockSpec((1, s_tile, N, d_node), lambda bb, sb: (bb, sb, 0, 0)),
            scratch_shapes=[pltpu.VMEM((rows, hc), jnp.bfloat16)],
        ),
        compiler_params=pltpu.CompilerParams(
            dimension_semantics=("parallel", "parallel"),
            vmem_limit_bytes=vmem_limit),
        input_output_aliases={0: 0},   # safe; in-place only if the caller donates M_raw
    )(M_raw, bias, mask4,
      prepared["ln_m_g"], prepared["ln_m_b"], prepared["wqkvg"],
      prepared["gating_b"], prepared["wo"], prepared["out_b"])
    return out


# ---------------------------------------------------------------------------
# Pure-JAX reference (for correctness check)
# ---------------------------------------------------------------------------
def reference(M_raw, Z, M_mask, params, *, c, n_head):
    def ln(x, g, b):
        mu = x.mean(-1, keepdims=True)
        var = jnp.square(x - mu).mean(-1, keepdims=True)
        return (x - mu) * jax.lax.rsqrt(var + EPS) * g + b

    B, S, N, d_node = M_raw.shape
    M = ln(M_raw, params["ln_m_g"], params["ln_m_b"])
    Zn = ln(Z, params["ln_z_g"], params["ln_z_b"])
    b = jnp.einsum("bijd,hd->bijh", Zn, params["w_b"])

    def proj(w):
        return jnp.einsum("bsnd,de->bsne", M, w).reshape(B, S, N, n_head, c)

    q = proj(params["wq"]) / math.sqrt(c)
    k = proj(params["wk"])
    v = proj(params["wv"])
    logits = jnp.einsum("bsiha,bsjha->bshij", q, k)
    logits = logits + jnp.transpose(b, (0, 3, 1, 2))[:, None]
    logits = logits + (1e9 * (M_mask - 1.0))[:, :, None, None, :]
    w = jax.nn.softmax(logits, axis=-1)
    wa = jnp.einsum("bshij,bsjha->bsiha", w, v).reshape(B, S, N, n_head * c)
    gate = jax.nn.sigmoid(
        jnp.einsum("bsnd,de->bsne", M, params["wg"]) + params["gating_b"])
    wa = wa * gate
    out = jnp.einsum("bsne,ed->bsnd", wa, params["wo"])
    return M_raw + out + params["out_b"]


# ---------------------------------------------------------------------------
if __name__ == "__main__":
    B, S, N = 2, 8, 16          # batch, N_seq (MSA rows), N_res
    d_node, d_pair = 32, 16
    c, n_head = 16, 4
    hc = n_head * c

    key = jax.random.PRNGKey(0)
    ks = jax.random.split(key, 12)

    M_raw = jax.random.normal(ks[0], (B, S, N, d_node), jnp.float32)
    Z = jax.random.normal(ks[1], (B, N, N, d_pair), jnp.float32)
    mask = jax.random.bernoulli(ks[2], 0.8, (B, S, N)).astype(jnp.float32)
    mask = mask.at[..., 0].set(1.0)   # at least one valid key per row

    # Deterministic synthetic parameters (same shapes as the PyTorch module; random values
    # instead of zero-init for gating/output projections so the kernel is non-trivial).
    params = {
        "ln_m_g": 1.0 + 0.1 * jax.random.normal(ks[3], (d_node,), jnp.float32),
        "ln_m_b": 0.1 * jax.random.normal(ks[4], (d_node,), jnp.float32),
        "ln_z_g": 1.0 + 0.1 * jax.random.normal(ks[5], (d_pair,), jnp.float32),
        "ln_z_b": 0.1 * jax.random.normal(ks[6], (d_pair,), jnp.float32),
        "w_b": jax.random.normal(ks[7], (n_head, d_pair), jnp.float32) / math.sqrt(d_pair),
        "wq": jax.random.normal(ks[8], (d_node, hc), jnp.float32) / math.sqrt(d_node),
        "wk": jax.random.normal(ks[9], (d_node, hc), jnp.float32) / math.sqrt(d_node),
        "wv": jax.random.normal(ks[10], (d_node, hc), jnp.float32) / math.sqrt(d_node),
        "wg": 0.1 * jax.random.normal(ks[11], (d_node, hc), jnp.float32),
        "gating_b": jnp.ones((hc,), jnp.float32),
        "wo": 0.1 * jax.random.normal(ks[0], (hc, d_node), jnp.float32),
        "out_b": 0.05 * jax.random.normal(ks[1], (d_node,), jnp.float32),
    }

    ref = reference(M_raw, Z, mask, params, c=c, n_head=n_head)

    prepared = prepare_params(params, c=c, n_head=n_head)   # one-time weight fusion/casts
    out = msa_row_attention_with_pair_bias(M_raw, Z, mask, prepared, c=c, n_head=n_head)
    out = jax.block_until_ready(out)

    assert out.shape == (B, S, N, d_node)
    # Tolerance accounts for bf16 MXU inputs / bf16-stored pair bias (f32 accumulation).
    assert jnp.allclose(out, ref, rtol=2e-2, atol=2e-2), \
        f"max err {jnp.max(jnp.abs(out - ref))}"

    print("KERNEL_OK")
</pallas_src>

<mosaic_0001>
module attributes {stable_mosaic.version = 11 : i64} {
  func.func @_pair_bias_kernel(%arg0: i32, %arg1: i32, %arg2: memref<1x16x16x16xf32, #tpu.memory_space<vmem>>, %arg3: memref<1x16xf32, #tpu.memory_space<vmem>>, %arg4: memref<1x16xf32, #tpu.memory_space<vmem>>, %arg5: memref<4x16xbf16, #tpu.memory_space<vmem>>, %arg6: memref<1x4x256xbf16, #tpu.memory_space<vmem>>) attributes {dimension_semantics = [#tpu.dimension_semantics<parallel>, #tpu.dimension_semantics<parallel>], iteration_bounds = array<i64: 2, 1>, scalar_prefetch = 0 : i64, scratch_operands = 0 : i64, tpu.core_type = #tpu.core_type<tc>, window_params = [{transform_indices = @transform_0, window_bounds = array<i64: 1, 16, 16, 16>}, {pipeline_mode = #tpu.pipeline_mode<synchronous>, transform_indices = @transform_1, window_bounds = array<i64: 1, 16>}, {pipeline_mode = #tpu.pipeline_mode<synchronous>, transform_indices = @transform_2, window_bounds = array<i64: 1, 16>}, {pipeline_mode = #tpu.pipeline_mode<synchronous>, transform_indices = @transform_3, window_bounds = array<i64: 4, 16>}, {transform_indices = @transform_4, window_bounds = array<i64: 1, 4, 256>}]} {
    %c0 = arith.constant 0 : index
    %c0_0 = arith.constant 0 : index
    %c0_1 = arith.constant 0 : index
    %c0_2 = arith.constant 0 : index
    %0 = vector.load %arg2[%c0, %c0_0, %c0_1, %c0_2] : memref<1x16x16x16xf32, #tpu.memory_space<vmem>>, vector<1x16x16x16xf32>
    %1 = vector.shape_cast %0 : vector<1x16x16x16xf32> to vector<16x16x16xf32>
    %cst = arith.constant dense<0.000000e+00> : vector<16x16xf32>
    %2 = vector.multi_reduction <add>, %1, %cst [2] : vector<16x16x16xf32> to vector<16x16xf32>
    %3 = vector.shape_cast %2 : vector<16x16xf32> to vector<16x16x1xf32>
    %cst_3 = arith.constant 1.600000e+01 : f32
    %4 = vector.broadcast %cst_3 : f32 to vector<16x16x1xf32>
    %5 = arith.divf %3, %4 : vector<16x16x1xf32>
    %6 = vector.broadcast %5 : vector<16x16x1xf32> to vector<16x16x16xf32>
    %7 = arith.subf %1, %6 : vector<16x16x16xf32>
    %8 = arith.mulf %7, %7 : vector<16x16x16xf32>
    %cst_4 = arith.constant dense<0.000000e+00> : vector<16x16xf32>
    %9 = vector.multi_reduction <add>, %8, %cst_4 [2] : vector<16x16x16xf32> to vector<16x16xf32>
    %10 = vector.shape_cast %9 : vector<16x16xf32> to vector<16x16x1xf32>
    %cst_5 = arith.constant 1.600000e+01 : f32
    %11 = vector.broadcast %cst_5 : f32 to vector<16x16x1xf32>
    %12 = arith.divf %10, %11 : vector<16x16x1xf32>
    %13 = vector.broadcast %5 : vector<16x16x1xf32> to vector<16x16x16xf32>
    %14 = arith.subf %1, %13 : vector<16x16x16xf32>
    %cst_6 = arith.constant 9.99999974E-6 : f32
    %15 = vector.broadcast %cst_6 : f32 to vector<16x16x1xf32>
    %16 = arith.addf %12, %15 : vector<16x16x1xf32>
    %17 = math.rsqrt %16 : vector<16x16x1xf32>
    %18 = vector.broadcast %17 : vector<16x16x1xf32> to vector<16x16x16xf32>
    %19 = arith.mulf %14, %18 : vector<16x16x16xf32>
    %c0_7 = arith.constant 0 : index
    %c0_8 = arith.constant 0 : index
    %20 = vector.load %arg3[%c0_7, %c0_8] : memref<1x16xf32, #tpu.memory_space<vmem>>, vector<1x16xf32>
    %21 = vector.shape_cast %20 : vector<1x16xf32> to vector<1x1x16xf32>
    %22 = vector.broadcast %21 : vector<1x1x16xf32> to vector<16x16x16xf32>
    %23 = arith.mulf %19, %22 : vector<16x16x16xf32>
    %c0_9 = arith.constant 0 : index
    %c0_10 = arith.constant 0 : index
    %24 = vector.load %arg4[%c0_9, %c0_10] : memref<1x16xf32, #tpu.memory_space<vmem>>, vector<1x16xf32>
    %25 = vector.shape_cast %24 : vector<1x16xf32> to vector<1x1x16xf32>
    %26 = vector.broadcast %25 : vector<1x1x16xf32> to vector<16x16x16xf32>
    %27 = arith.addf %23, %26 : vector<16x16x16xf32>
    %28 = vector.shape_cast %27 : vector<16x16x16xf32> to vector<256x16xf32>
    %29 = arith.truncf %28 : vector<256x16xf32> to vector<256x16xbf16>
    %c0_11 = arith.constant 0 : index
    %c0_12 = arith.constant 0 : index
    %30 = vector.load %arg5[%c0_11, %c0_12] : memref<4x16xbf16, #tpu.memory_space<vmem>>, vector<4x16xbf16>
    %cst_13 = arith.constant dense<0.000000e+00> : vector<4x256xf32>
    %31 = tpu.matmul %30, %29, %cst_13 {dimension_numbers = #tpu.dot_dimension_numbers<[1], [1], [0], [0], [0, 0, 1, 0], [], []>} : vector<4x16xbf16>, vector<256x16xbf16>, vector<4x256xf32> -> vector<4x256xf32>
    %32 = arith.truncf %31 : vector<4x256xf32> to vector<4x256xbf16>
    %c0_14 = arith.constant 0 : index
    %c0_15 = arith.constant 0 : index
    %c0_16 = arith.constant 0 : index
    %33 = vector.load %arg6[%c0_14, %c0_15, %c0_16] : memref<1x4x256xbf16, #tpu.memory_space<vmem>>, vector<1x4x256xbf16>
    %34 = vector.shape_cast %33 : vector<1x4x256xbf16> to vector<4x256xbf16>
    %35 = vector.shape_cast %32 : vector<4x256xbf16> to vector<1x4x256xbf16>
    tpu.vector_store %arg6[%c0_14, %c0_15, %c0_16], %35 {strides = array<i32>} : memref<1x4x256xbf16, #tpu.memory_space<vmem>>, vector<1x4x256xbf16>,
    return
  }
  func.func @transform_0(%arg0: i32, %arg1: i32) -> (i32, i32, i32, i32) {
    %c0_i32 = arith.constant 0 : i32
    %c0_i32_0 = arith.constant 0 : i32
    %c0_i32_1 = arith.constant 0 : i32
    return %arg0, %arg1, %c0_i32, %c0_i32_0 : i32, i32, i32, i32
  }
  func.func @transform_1(%arg0: i32, %arg1: i32) -> (i32, i32) {
    %c0_i32 = arith.constant 0 : i32
    %c0_i32_0 = arith.constant 0 : i32
    %c0_i32_1 = arith.constant 0 : i32
    return %c0_i32, %c0_i32_0 : i32, i32
  }
  func.func @transform_2(%arg0: i32, %arg1: i32) -> (i32, i32) {
    %c0_i32 = arith.constant 0 : i32
    %c0_i32_0 = arith.constant 0 : i32
    %c0_i32_1 = arith.constant 0 : i32
    return %c0_i32, %c0_i32_0 : i32, i32
  }
  func.func @transform_3(%arg0: i32, %arg1: i32) -> (i32, i32) {
    %c0_i32 = arith.constant 0 : i32
    %c0_i32_0 = arith.constant 0 : i32
    %c0_i32_1 = arith.constant 0 : i32
    return %c0_i32, %c0_i32_0 : i32, i32
  }
  func.func @transform_4(%arg0: i32, %arg1: i32) -> (i32, i32, i32) {
    %c0_i32 = arith.constant 0 : i32
    %c0_i32_0 = arith.constant 0 : i32
    return %arg0, %c0_i32, %arg1 : i32, i32, i32
  }
}

</mosaic_0001>

<llo_original>
// kernel: tpu_custom_call.1
$region0: #{tpu_custom_call.1}
  #allocation0 [shape = 'u32[]', space=smem, size = 0x4, offset = 0x4, fixed_abs, tag = 'smem constant byte address 0x4 - core index']
  #allocation1 [shape = 'u32[144,128]{1,0:T(1,128)}', space=vmem, size = 0x12000, scoped, tag = 'internal scratch']
  %s0 = inlined_call_operand.hbm [shape: f32[2,16,16,16], index: 0, kind: input, shape index: {}]
  %s1 = inlined_call_operand.vmem [shape: f32[1,16], index: 1, kind: input, shape index: {}]
  %s2 = inlined_call_operand.vmem [shape: f32[1,16], index: 2, kind: input, shape index: {}]
  %s3 = inlined_call_operand.vmem [shape: bf16[4,16], index: 3, kind: input, shape index: {}]
  %s4 = inlined_call_operand.hbm [shape: bf16[2,4,256], index: 4, kind: output, shape index: {}]
  %s5 = sld [smem:[#allocation0]]
  $region53: #{tpu_custom_call.1} parent=0
    _
  %s7 = ssub.s32 1, %s5
  %s8 = scalar_select 0, %s7, %s5
  $region1: #{tpu_custom_call.1} parent=0
    #allocation2 [shape = 'u8[262144]{0}', space=vmem, size = 0x40000, scoped, tag = 'input window, operand 0']
    #allocation3 [shape = 's32[2]{0}', space=sflag, size = 0x8, scoped, tag = 'scoped memory for tpu_custom_call.1']
    #allocation4 [shape = 's32[2]{0}', space=sflag, size = 0x8, scoped, tag = 'scoped memory for tpu_custom_call.1']
    #allocation5 [shape = 'u8[4096]{0}', space=vmem, size = 0x1000, scoped, tag = 'output window, operand 0']
    %9 = vsyncpa [#allocation3], 0
    %s10 = scalar_lea.sflag [#allocation3], 1
    %11 = vsyncpa %s10, 0
    %12 = vsyncpa [#allocation4], 0
    %s13 = scalar_lea.sflag [#allocation4], 1
    %14 = vsyncpa %s13, 0
    loop: start=0, step=1, limit=4
    $region2: #{tpu_custom_call.1} parent=1 // loop_pre_header
      _
    $region3: #{tpu_custom_call.1} parent=1 // loop_header
      %s16 = sphi 0, %s20
      %p17 = scmp.ge.s32.totalorder %s16, 4
      %s23 = sphi 0, %s35
      %s24 = sphi 0, %s31
      %s25 = sphi 0, %s23
      %s26 = sphi 0, %s24
      %s27 = sphi 0, %s25
      %s28 = sphi 0, %s26
      %s40 = sphi 0, %s42
      %s43 = sphi 0, %s40
      %s44 = sphi 0, %s43
      %s60 = sphi 0, %s44
      %s64 = sphi 0, %s64
      %s66 = sphi 0, %s64
      %s67 = sphi 0, %s66
      %s81 = sphi 0, %s67
      %s85 = sphi 0, %s85
      %s87 = sphi 0, %s85
      %s88 = sphi 0, %s87
      %s102 = sphi 0, %s88
      %s106 = sphi 0, %s106
      %s108 = sphi 0, %s106
      %s109 = sphi 0, %s108
      %s123 = sphi 0, %s109
      %s131 = sphi 0, %s133
      %s134 = sphi 0, %s131
      %s135 = sphi 0, %s134
      %s151 = sphi 0, %s135
    $region4: #{tpu_custom_call.1} parent=1 // loop_header_branch
      %19 = sbr.rel (%p17) target = $region8
    $region5: #{tpu_custom_call.1} parent=1 // loop_body
      %s21 = ssub.s32 %s16, 1
      %s22 = ssub.s32 %s16, 2
      %s29 = sadd.s32 1, %s24
      %p30 = scmp.ge.s32.totalorder %s29, 1
      %s31 = scalar_select %p30, 0, %s29
      %s32 = sadd.s32 1, %s23
      %s33 = scalar_select %p30, %s32, %s23
      %p34 = scmp.ge.s32.totalorder %s33, 2
      %s35 = scalar_select %p34, 0, %s33
      %s36 = ssub.s32 %s23, %s35
      %s37 = ssub.s32 %s24, %s31
      %s38 = sor.u32 %s36, %s37
      %p39 = scmp.eq.s32.totalorder %s38, 0
      %s41 = sadd.s32 %s40, 1
      %s42 = scalar_select %p39, %s40, %s41
      %p45 = pneg %p39
      %p46 = scmp.eq.s32.totalorder %s16, 1
      %p47 = por %p45, %p46
      %p48 = scmp.ne.s32.totalorder %s40, %s43
      %p49 = scmp.eq.s32.totalorder %s16, 0
      %p50 = por %p48, %p49
      %p51 = scmp.ne.s32.totalorder %s40, %s43
      %p52 = scmp.eq.s32.totalorder %s21, 1
      %p53 = por %p51, %p52
      %p54 = scmp.ne.s32.totalorder %s43, %s44
      %p55 = scmp.eq.s32.totalorder %s21, 0
      %p56 = por %p54, %p55
      %p57 = scmp.ne.s32.totalorder %s43, %s44
      %p58 = scmp.eq.s32.totalorder %s22, 1
      %p59 = por %p57, %p58
      %p61 = scmp.ne.s32.totalorder %s44, %s60
      %p62 = scmp.eq.s32.totalorder %s22, 0
      %p63 = por %p61, %p62
      %s65 = sadd.s32 %s64, 1
      %p68 = scmp.eq.s32.totalorder %s16, 1
      %p69 = scmp.ne.s32.totalorder %s64, %s66
      %p70 = scmp.eq.s32.totalorder %s16, 0
      %p71 = por %p69, %p70
      %p72 = scmp.ne.s32.totalorder %s64, %s66
      %p73 = scmp.eq.s32.totalorder %s21, 1
      %p74 = por %p72, %p73
      %p75 = scmp.ne.s32.totalorder %s66, %s67
      %p76 = scmp.eq.s32.totalorder %s21, 0
      %p77 = por %p75, %p76
      %p78 = scmp.ne.s32.totalorder %s66, %s67
      %p79 = scmp.eq.s32.totalorder %s22, 1
      %p80 = por %p78, %p79
      %p82 = scmp.ne.s32.totalorder %s67, %s81
      %p83 = scmp.eq.s32.totalorder %s22, 0
      %p84 = por %p82, %p83
      %s86 = sadd.s32 %s85, 1
      %p89 = scmp.eq.s32.totalorder %s16, 1
      %p90 = scmp.ne.s32.totalorder %s85, %s87
      %p91 = scmp.eq.s32.totalorder %s16, 0
      %p92 = por %p90, %p91
      %p93 = scmp.ne.s32.totalorder %s85, %s87
      %p94 = scmp.eq.s32.totalorder %s21, 1
      %p95 = por %p93, %p94
      %p96 = scmp.ne.s32.totalorder %s87, %s88
      %p97 = scmp.eq.s32.totalorder %s21, 0
      %p98 = por %p96, %p97
      %p99 = scmp.ne.s32.totalorder %s87, %s88
      %p100 = scmp.eq.s32.totalorder %s22, 1
      %p101 = por %p99, %p100
      %p103 = scmp.ne.s32.totalorder %s88, %s102
      %p104 = scmp.eq.s32.totalorder %s22, 0
      %p105 = por %p103, %p104
      %s107 = sadd.s32 %s106, 1
      %p110 = scmp.eq.s32.totalorder %s16, 1
      %p111 = scmp.ne.s32.totalorder %s106, %s108
      %p112 = scmp.eq.s32.totalorder %s16, 0
      %p113 = por %p111, %p112
      %p114 = scmp.ne.s32.totalorder %s106, %s108
      %p115 = scmp.eq.s32.totalorder %s21, 1
      %p116 = por %p114, %p115
      %p117 = scmp.ne.s32.totalorder %s108, %s109
      %p118 = scmp.eq.s32.totalorder %s21, 0
      %p119 = por %p117, %p118
      %p120 = scmp.ne.s32.totalorder %s108, %s109
      %p121 = scmp.eq.s32.totalorder %s22, 1
      %p122 = por %p120, %p121
      %p124 = scmp.ne.s32.totalorder %s109, %s123
      %p125 = scmp.eq.s32.totalorder %s22, 0
      %p126 = por %p124, %p125
      %s127 = ssub.s32 %s23, %s35
      %s128 = ssub.s32 %s24, %s31
      %s129 = sor.u32 %s127, %s128
      %p130 = scmp.eq.s32.totalorder %s129, 0
      %s132 = sadd.s32 %s131, 1
      %s133 = scalar_select %p130, %s131, %s132
      %p136 = pneg %p130
      %p137 = scmp.eq.s32.totalorder %s16, 1
      %p138 = por %p136, %p137
      %p139 = scmp.ne.s32.totalorder %s131, %s134
      %p140 = scmp.eq.s32.totalorder %s16, 0
      %p141 = por %p139, %p140
      %p142 = scmp.ne.s32.totalorder %s131, %s134
      %p143 = scmp.eq.s32.totalorder %s21, 1
      %p144 = por %p142, %p143
      %p145 = scmp.ne.s32.totalorder %s134, %s135
      %p146 = scmp.eq.s32.totalorder %s21, 0
      %p147 = por %p145, %p146
      %p148 = scmp.ne.s32.totalorder %s134, %s135
      %p149 = scmp.eq.s32.totalorder %s22, 1
      %p150 = por %p148, %p149
      %p152 = scmp.ne.s32.totalorder %s135, %s151
      %p153 = scmp.eq.s32.totalorder %s22, 0
      %p154 = por %p152, %p153
      %p155 = scmp.le.s32.totalorder 1, %s16
      %p156 = scmp.lt.s32.totalorder %s16, 3
      %p157 = pnand %p155, %p156
      %p158 = pneg %p157
      // Predicated region
      $region9: #{tpu_custom_call.1} parent=5 // pred_check
        _
      $region10: #{tpu_custom_call.1} parent=5 // pred_check_branch
        %160 = sbr.rel (%p157) target = $region12
      $region11: #{tpu_custom_call.1} parent=5 // pred_region
        %s161 = ssub.s32 %s16, 1
        // Predicated region
        $region13: #{tpu_custom_call.1} parent=11 // pred_check
          %p162 = pneg %p77
        $region14: #{tpu_custom_call.1} parent=11 // pred_check_branch
          %164 = sbr.rel (%p162) target = $region16
        $region15: #{tpu_custom_call.1} parent=11 // pred_region
          _
        $region16: #{tpu_custom_call.1} parent=11 // pred_fallthru
          _
        // Predicated region
        $region17: #{tpu_custom_call.1} parent=11 // pred_check
          %p165 = pneg %p98
        $region18: #{tpu_custom_call.1} parent=11 // pred_check_branch
          %167 = sbr.rel (%p165) target = $region20
        $region19: #{tpu_custom_call.1} parent=11 // pred_region
          _
        $region20: #{tpu_custom_call.1} parent=11 // pred_fallthru
          _
        // Predicated region
        $region21: #{tpu_custom_call.1} parent=11 // pred_check
          %p168 = pneg %p119
        $region22: #{tpu_custom_call.1} parent=11 // pred_check_branch
          %170 = sbr.rel (%p168) target = $region24
        $region23: #{tpu_custom_call.1} parent=11 // pred_region
          _
        $region24: #{tpu_custom_call.1} parent=11 // pred_fallthru
          _
      $region12: #{tpu_custom_call.1} parent=5 // pred_fallthru
        _
      %p171 = scmp.lt.s32.totalorder %s16, 2
      // Predicated region
      $region25: #{tpu_custom_call.1} parent=5 // pred_check
        %p172 = pneg %p171
      $region26: #{tpu_custom_call.1} parent=5 // pred_check_branch
        %174 = sbr.rel (%p172) target = $region28
      $region27: #{tpu_custom_call.1} parent=5 // pred_region
        // Predicated region
        $region29: #{tpu_custom_call.1} parent=27 // pred_check
          %p175 = pneg %p50
        $region30: #{tpu_custom_call.1} parent=27 // pred_check_branch
          %177 = sbr.rel (%p175) target = $region32
        $region31: #{tpu_custom_call.1} parent=27 // pred_region
          %s178 = sand.u32 %s40, 1
          %s179 = scalar_lea.sflag [#allocation3], %s178
          %s180 = sand.u32 %s40, 1
          %s181 = smul.addr %s180, 256
          %s182 = scalar_lea.vmem [#allocation2], %s181
          %s183 = smul.u32 16, %s24
          %s185 = ssub.s32 4096, 4096
          %186 = vsyncadd %s179, %s185
          %s187 = smul.addr %s183, 2
          %s188 = smul.addr %s23, 32
          %s189 = sadd.s32 %s187, %s188
          %s190 = smul.addr %s189, 128
          %s191 = scalar_lea.hbm %s0, %s190
          %s192 = sshll.u32 %s182, 4
          %s193 = int_to_ptr.vmem [resolvable:$true] %s192
          %198 = dma.hbm_to_vmem [thread:$0]  %s191, 4096, %s193, %s179, 128, 128, 8
        $region32: #{tpu_custom_call.1} parent=27 // pred_fallthru
          _
      $region28: #{tpu_custom_call.1} parent=5 // pred_fallthru
        _
      %p199 = scmp.le.s32.totalorder 1, %s16
      %p200 = scmp.lt.s32.totalorder %s16, 3
      %p201 = pnand %p199, %p200
      %p202 = pneg %p201
      // Predicated region
      $region33: #{tpu_custom_call.1} parent=5 // pred_check
        _
      $region34: #{tpu_custom_call.1} parent=5 // pred_check_branch
        %204 = sbr.rel (%p201) target = $region36
      $region35: #{tpu_custom_call.1} parent=5 // pred_region
        %s205 = ssub.s32 %s16, 1
        %s206 = sand.u32 %s43, 1
        %s207 = scalar_lea.sflag [#allocation3], %s206
        %s208 = sand.u32 %s43, 1
        %s209 = smul.addr %s208, 256
        %s210 = scalar_lea.vmem [#allocation2], %s209
        // Predicated region
        $region37: #{tpu_custom_call.1} parent=35 // pred_check
          %p211 = pneg %p56
        $region38: #{tpu_custom_call.1} parent=35 // pred_check_branch
          %213 = sbr.rel (%p211) target = $region40
        $region39: #{tpu_custom_call.1} parent=35 // pred_region
          %214 = dma.done %s207, 4096
        $region40: #{tpu_custom_call.1} parent=35 // pred_fallthru
          _
        %s215 = sand.u32 %s43, 1
        %s216 = scalar_lea.sflag [#allocation3], %s215
        %s217 = sand.u32 %s43, 1
        %s218 = smul.addr %s217, 256
        %s219 = scalar_lea.vmem [#allocation2], %s218
        %p220 = pneg %p56
        %p221 = pneg %p53
        %p222 = pneg %p77
        %p223 = pneg %p74
        %p224 = pneg %p98
        %p225 = pneg %p95
        %p226 = pneg %p119
        %p227 = pneg %p116
        %p228 = pneg %p147
        %p229 = pneg %p144
        %s230 = sand.u32 %s134, 1
        %s231 = scalar_lea.sflag [#allocation4], %s230
        %s232 = sand.u32 %s134, 1
        %s233 = smul.addr %s232, 4
        %s234 = scalar_lea.vmem [#allocation5], %s233
        %s235 = smul.u32 16, %s26
        %s236 = smul.u32 2, %s26
        %v238 = vld [vmem:[%s210] sm:$0xff]
        %v239 = vld [vmem:[%s210 + $0x8] sm:$0xff]
        %v240 = vld [vmem:[%s210 + $0x10] sm:$0xff]
        %v241 = vld [vmem:[%s210 + $0x18] sm:$0xff]
        %v242 = vld [vmem:[%s210 + $0x20] sm:$0xff]
        %v243 = vld [vmem:[%s210 + $0x28] sm:$0xff]
        %v244 = vld [vmem:[%s210 + $0x30] sm:$0xff]
        %v245 = vld [vmem:[%s210 + $0x38] sm:$0xff]
        %v246 = vld [vmem:[%s210 + $0x40] sm:$0xff]
        %v247 = vld [vmem:[%s210 + $0x48] sm:$0xff]
        %v248 = vld [vmem:[%s210 + $0x50] sm:$0xff]
        %v249 = vld [vmem:[%s210 + $0x58] sm:$0xff]
        %v250 = vld [vmem:[%s210 + $0x60] sm:$0xff]
        %v251 = vld [vmem:[%s210 + $0x68] sm:$0xff]
        %v252 = vld [vmem:[%s210 + $0x70] sm:$0xff]
        %v253 = vld [vmem:[%s210 + $0x78] sm:$0xff]
        %v254 = vld [vmem:[%s210 + $0x80] sm:$0xff]
        %v255 = vld [vmem:[%s210 + $0x88] sm:$0xff]
        %v256 = vld [vmem:[%s210 + $0x90] sm:$0xff]
        %v257 = vld [vmem:[%s210 + $0x98] sm:$0xff]
        %v258 = vld [vmem:[%s210 + $0xa0] sm:$0xff]
        %v259 = vld [vmem:[%s210 + $0xa8] sm:$0xff]
        %v260 = vld [vmem:[%s210 + $0xb0] sm:$0xff]
        %v261 = vld [vmem:[%s210 + $0xb8] sm:$0xff]
        %v262 = vld [vmem:[%s210 + $0xc0] sm:$0xff]
        %v263 = vld [vmem:[%s210 + $0xc8] sm:$0xff]
        %v264 = vld [vmem:[%s210 + $0xd0] sm:$0xff]
        %v265 = vld [vmem:[%s210 + $0xd8] sm:$0xff]
        %v266 = vld [vmem:[%s210 + $0xe0] sm:$0xff]
        %v267 = vld [vmem:[%s210 + $0xe8] sm:$0xff]
        %v268 = vld [vmem:[%s210 + $0xf0] sm:$0xff]
        %v269 = vld [vmem:[%s210 + $0xf8] sm:$0xff]
        %vm270 = vcmask 130048
        %v271 = vsel %vm270, %v238, 0.0
        %272 = vadd.xlane.f32.xlu0 %v271
        %v273 = vpop.xlane.xlu0 %272
        %v274 = vsel %vm270, %v239, 0.0
        %275 = vadd.xlane.f32.xlu0 %v274
        %v276 = vpop.xlane.xlu0 %275
        %v277 = vsel %vm270, %v240, 0.0
        %278 = vadd.xlane.f32.xlu0 %v277
        %v279 = vpop.xlane.xlu0 %278
        %v280 = vsel %vm270, %v241, 0.0
        %281 = vadd.xlane.f32.xlu0 %v280
        %v282 = vpop.xlane.xlu0 %281
        %v283 = vsel %vm270, %v242, 0.0
        %284 = vadd.xlane.f32.xlu0 %v283
        %v285 = vpop.xlane.xlu0 %284
        %v286 = vsel %vm270, %v243, 0.0
        %287 = vadd.xlane.f32.xlu0 %v286
        %v288 = vpop.xlane.xlu0 %287
        %v289 = vsel %vm270, %v244, 0.0
        %290 = vadd.xlane.f32.xlu0 %v289
        %v291 = vpop.xlane.xlu0 %290
        %v292 = vsel %vm270, %v245, 0.0
        %293 = vadd.xlane.f32.xlu0 %v292
        %v294 = vpop.xlane.xlu0 %293
        %v295 = vsel %vm270, %v246, 0.0
        %296 = vadd.xlane.f32.xlu0 %v295
        %v297 = vpop.xlane.xlu0 %296
        %v298 = vsel %vm270, %v247, 0.0
        %299 = vadd.xlane.f32.xlu0 %v298
        %v300 = vpop.xlane.xlu0 %299
        %v301 = vsel %vm270, %v248, 0.0
        %302 = vadd.xlane.f32.xlu0 %v301
        %v303 = vpop.xlane.xlu0 %302
        %v304 = vsel %vm270, %v249, 0.0
        %305 = vadd.xlane.f32.xlu0 %v304
        %v306 = vpop.xlane.xlu0 %305
        %v307 = vsel %vm270, %v250, 0.0
        %308 = vadd.xlane.f32.xlu0 %v307
        %v309 = vpop.xlane.xlu0 %308
        %v310 = vsel %vm270, %v251, 0.0
        %311 = vadd.xlane.f32.xlu0 %v310
        %v312 = vpop.xlane.xlu0 %311
        %v313 = vsel %vm270, %v252, 0.0
        %314 = vadd.xlane.f32.xlu0 %v313
        %v315 = vpop.xlane.xlu0 %314
        %v316 = vsel %vm270, %v253, 0.0
        %317 = vadd.xlane.f32.xlu0 %v316
        %v318 = vpop.xlane.xlu0 %317
        %v319 = vsel %vm270, %v254, 0.0
        %320 = vadd.xlane.f32.xlu0 %v319
        %v321 = vpop.xlane.xlu0 %320
        %v322 = vsel %vm270, %v255, 0.0
        %323 = vadd.xlane.f32.xlu0 %v322
        %v324 = vpop.xlane.xlu0 %323
        %v325 = vsel %vm270, %v256, 0.0
        %326 = vadd.xlane.f32.xlu0 %v325
        %v327 = vpop.xlane.xlu0 %326
        %v328 = vsel %vm270, %v257, 0.0
        %329 = vadd.xlane.f32.xlu0 %v328
        %v330 = vpop.xlane.xlu0 %329
        %v331 = vsel %vm270, %v258, 0.0
        %332 = vadd.xlane.f32.xlu0 %v331
        %v333 = vpop.xlane.xlu0 %332
        %v334 = vsel %vm270, %v259, 0.0
        %335 = vadd.xlane.f32.xlu0 %v334
        %v336 = vpop.xlane.xlu0 %335
        %v337 = vsel %vm270, %v260, 0.0
        %338 = vadd.xlane.f32.xlu0 %v337
        %v339 = vpop.xlane.xlu0 %338
        %v340 = vsel %vm270, %v261, 0.0
        %341 = vadd.xlane.f32.xlu0 %v340
        %v342 = vpop.xlane.xlu0 %341
        %v343 = vsel %vm270, %v262, 0.0
        %344 = vadd.xlane.f32.xlu0 %v343
        %v345 = vpop.xlane.xlu0 %344
        %v346 = vsel %vm270, %v263, 0.0
        %347 = vadd.xlane.f32.xlu0 %v346
        %v348 = vpop.xlane.xlu0 %347
        %v349 = vsel %vm270, %v264, 0.0
        %350 = vadd.xlane.f32.xlu0 %v349
        %v351 = vpop.xlane.xlu0 %350
        %v352 = vsel %vm270, %v265, 0.0
        %353 = vadd.xlane.f32.xlu0 %v352
        %v354 = vpop.xlane.xlu0 %353
        %v355 = vsel %vm270, %v266, 0.0
        %356 = vadd.xlane.f32.xlu0 %v355
        %v357 = vpop.xlane.xlu0 %356
        %v358 = vsel %vm270, %v267, 0.0
        %359 = vadd.xlane.f32.xlu0 %v358
        %v360 = vpop.xlane.xlu0 %359
        %v361 = vsel %vm270, %v268, 0.0
        %362 = vadd.xlane.f32.xlu0 %v361
        %v363 = vpop.xlane.xlu0 %362
        %v364 = vsel %vm270, %v269, 0.0
        %365 = vadd.xlane.f32.xlu0 %v364
        %v366 = vpop.xlane.xlu0 %365
        %v367 = vrcp.pop 16.0
        %v368 = vmul.f32 %v273, %v367
        %v369 = vmul.f32 %v276, %v367
        %v370 = vmul.f32 %v279, %v367
        %v371 = vmul.f32 %v282, %v367
        %v372 = vmul.f32 %v285, %v367
        %v373 = vmul.f32 %v288, %v367
        %v374 = vmul.f32 %v291, %v367
        %v375 = vmul.f32 %v294, %v367
        %v376 = vmul.f32 %v297, %v367
        %v377 = vmul.f32 %v300, %v367
        %v378 = vmul.f32 %v303, %v367
        %v379 = vmul.f32 %v306, %v367
        %v380 = vmul.f32 %v309, %v367
        %v381 = vmul.f32 %v312, %v367
        %v382 = vmul.f32 %v315, %v367
        %v383 = vmul.f32 %v318, %v367
        %v384 = vmul.f32 %v321, %v367
        %v385 = vmul.f32 %v324, %v367
        %v386 = vmul.f32 %v327, %v367
        %v387 = vmul.f32 %v330, %v367
        %v388 = vmul.f32 %v333, %v367
        %v389 = vmul.f32 %v336, %v367
        %v390 = vmul.f32 %v339, %v367
        %v391 = vmul.f32 %v342, %v367
        %v392 = vmul.f32 %v345, %v367
        %v393 = vmul.f32 %v348, %v367
        %v394 = vmul.f32 %v351, %v367
        %v395 = vmul.f32 %v354, %v367
        %v396 = vmul.f32 %v357, %v367
        %v397 = vmul.f32 %v360, %v367
        %v398 = vmul.f32 %v363, %v367
        %v399 = vmul.f32 %v366, %v367
        %v400 = vsub.f32 %v238, %v368
        %v401 = vsub.f32 %v239, %v369
        %v402 = vsub.f32 %v240, %v370
        %v403 = vsub.f32 %v241, %v371
        %v404 = vsub.f32 %v242, %v372
        %v405 = vsub.f32 %v243, %v373
        %v406 = vsub.f32 %v244, %v374
        %v407 = vsub.f32 %v245, %v375
        %v408 = vsub.f32 %v246, %v376
        %v409 = vsub.f32 %v247, %v377
        %v410 = vsub.f32 %v248, %v378
        %v411 = vsub.f32 %v249, %v379
        %v412 = vsub.f32 %v250, %v380
        %v413 = vsub.f32 %v251, %v381
        %v414 = vsub.f32 %v252, %v382
        %v415 = vsub.f32 %v253, %v383
        %v416 = vsub.f32 %v254, %v384
        %v417 = vsub.f32 %v255, %v385
        %v418 = vsub.f32 %v256, %v386
        %v419 = vsub.f32 %v257, %v387
        %v420 = vsub.f32 %v258, %v388
        %v421 = vsub.f32 %v259, %v389
        %v422 = vsub.f32 %v260, %v390
        %v423 = vsub.f32 %v261, %v391
        %v424 = vsub.f32 %v262, %v392
        %v425 = vsub.f32 %v263, %v393
        %v426 = vsub.f32 %v264, %v394
        %v427 = vsub.f32 %v265, %v395
        %v428 = vsub.f32 %v266, %v396
        %v429 = vsub.f32 %v267, %v397
        %v430 = vsub.f32 %v268, %v398
        %v431 = vsub.f32 %v269, %v399
        %v432 = vmul.f32 %v400, %v400
        %v433 = vmul.f32 %v401, %v401
        %v434 = vmul.f32 %v402, %v402
        %v435 = vmul.f32 %v403, %v403
        %v436 = vmul.f32 %v404, %v404
        %v437 = vmul.f32 %v405, %v405
        %v438 = vmul.f32 %v406, %v406
        %v439 = vmul.f32 %v407, %v407
        %v440 = vmul.f32 %v408, %v408
        %v441 = vmul.f32 %v409, %v409
        %v442 = vmul.f32 %v410, %v410
        %v443 = vmul.f32 %v411, %v411
        %v444 = vmul.f32 %v412, %v412
        %v445 = vmul.f32 %v413, %v413
        %v446 = vmul.f32 %v414, %v414
        %v447 = vmul.f32 %v415, %v415
        %v448 = vmul.f32 %v416, %v416
        %v449 = vmul.f32 %v417, %v417
        %v450 = vmul.f32 %v418, %v418
        %v451 = vmul.f32 %v419, %v419
        %v452 = vmul.f32 %v420, %v420
        %v453 = vmul.f32 %v421, %v421
        %v454 = vmul.f32 %v422, %v422
        %v455 = vmul.f32 %v423, %v423
        %v456 = vmul.f32 %v424, %v424
        %v457 = vmul.f32 %v425, %v425
        %v458 = vmul.f32 %v426, %v426
        %v459 = vmul.f32 %v427, %v427
        %v460 = vmul.f32 %v428, %v428
        %v461 = vmul.f32 %v429, %v429
        %v462 = vmul.f32 %v430, %v430
        %v463 = vmul.f32 %v431, %v431
        %v464 = vsel %vm270, %v432, 0.0
        %465 = vadd.xlane.f32.xlu0 %v464
        %v466 = vpop.xlane.xlu0 %465
        %v467 = vsel %vm270, %v433, 0.0
        %468 = vadd.xlane.f32.xlu0 %v467
        %v469 = vpop.xlane.xlu0 %468
        %v470 = vsel %vm270, %v434, 0.0
        %471 = vadd.xlane.f32.xlu0 %v470
        %v472 = vpop.xlane.xlu0 %471
        %v473 = vsel %vm270, %v435, 0.0
        %474 = vadd.xlane.f32.xlu0 %v473
        %v475 = vpop.xlane.xlu0 %474
        %v476 = vsel %vm270, %v436, 0.0
        %477 = vadd.xlane.f32.xlu0 %v476
        %v478 = vpop.xlane.xlu0 %477
        %v479 = vsel %vm270, %v437, 0.0
        %480 = vadd.xlane.f32.xlu0 %v479
        %v481 = vpop.xlane.xlu0 %480
        %v482 = vsel %vm270, %v438, 0.0
        %483 = vadd.xlane.f32.xlu0 %v482
        %v484 = vpop.xlane.xlu0 %483
        %v485 = vsel %vm270, %v439, 0.0
        %486 = vadd.xlane.f32.xlu0 %v485
        %v487 = vpop.xlane.xlu0 %486
        %v488 = vsel %vm270, %v440, 0.0
        %489 = vadd.xlane.f32.xlu0 %v488
        %v490 = vpop.xlane.xlu0 %489
        %v491 = vsel %vm270, %v441, 0.0
        %492 = vadd.xlane.f32.xlu0 %v491
        %v493 = vpop.xlane.xlu0 %492
        %v494 = vsel %vm270, %v442, 0.0
        %495 = vadd.xlane.f32.xlu0 %v494
        %v496 = vpop.xlane.xlu0 %495
        %v497 = vsel %vm270, %v443, 0.0
        %498 = vadd.xlane.f32.xlu0 %v497
        %v499 = vpop.xlane.xlu0 %498
        %v500 = vsel %vm270, %v444, 0.0
        %501 = vadd.xlane.f32.xlu0 %v500
        %v502 = vpop.xlane.xlu0 %501
        %v503 = vsel %vm270, %v445, 0.0
        %504 = vadd.xlane.f32.xlu0 %v503
        %v505 = vpop.xlane.xlu0 %504
        %v506 = vsel %vm270, %v446, 0.0
        %507 = vadd.xlane.f32.xlu0 %v506
        %v508 = vpop.xlane.xlu0 %507
        %v509 = vsel %vm270, %v447, 0.0
        %510 = vadd.xlane.f32.xlu0 %v509
        %v511 = vpop.xlane.xlu0 %510
        %v512 = vsel %vm270, %v448, 0.0
        %513 = vadd.xlane.f32.xlu0 %v512
        %v514 = vpop.xlane.xlu0 %513
        %v515 = vsel %vm270, %v449, 0.0
        %516 = vadd.xlane.f32.xlu0 %v515
        %v517 = vpop.xlane.xlu0 %516
        %v518 = vsel %vm270, %v450, 0.0
        %519 = vadd.xlane.f32.xlu0 %v518
        %v520 = vpop.xlane.xlu0 %519
        %v521 = vsel %vm270, %v451, 0.0
        %522 = vadd.xlane.f32.xlu0 %v521
        %v523 = vpop.xlane.xlu0 %522
        %v524 = vsel %vm270, %v452, 0.0
        %525 = vadd.xlane.f32.xlu0 %v524
        %v526 = vpop.xlane.xlu0 %525
        %v527 = vsel %vm270, %v453, 0.0
        %528 = vadd.xlane.f32.xlu0 %v527
        %v529 = vpop.xlane.xlu0 %528
        %v530 = vsel %vm270, %v454, 0.0
        %531 = vadd.xlane.f32.xlu0 %v530
        %v532 = vpop.xlane.xlu0 %531
        %v533 = vsel %vm270, %v455, 0.0
        %534 = vadd.xlane.f32.xlu0 %v533
        %v535 = vpop.xlane.xlu0 %534
        %v536 = vsel %vm270, %v456, 0.0
        %537 = vadd.xlane.f32.xlu0 %v536
        %v538 = vpop.xlane.xlu0 %537
        %v539 = vsel %vm270, %v457, 0.0
        %540 = vadd.xlane.f32.xlu0 %v539
        %v541 = vpop.xlane.xlu0 %540
        %v542 = vsel %vm270, %v458, 0.0
        %543 = vadd.xlane.f32.xlu0 %v542
        %v544 = vpop.xlane.xlu0 %543
        %v545 = vsel %vm270, %v459, 0.0
        %546 = vadd.xlane.f32.xlu0 %v545
        %v547 = vpop.xlane.xlu0 %546
        %v548 = vsel %vm270, %v460, 0.0
        %549 = vadd.xlane.f32.xlu0 %v548
        %v550 = vpop.xlane.xlu0 %549
        %v551 = vsel %vm270, %v461, 0.0
        %552 = vadd.xlane.f32.xlu0 %v551
        %v553 = vpop.xlane.xlu0 %552
        %v554 = vsel %vm270, %v462, 0.0
        %555 = vadd.xlane.f32.xlu0 %v554
        %v556 = vpop.xlane.xlu0 %555
        %v557 = vsel %vm270, %v463, 0.0
        %558 = vadd.xlane.f32.xlu0 %v557
        %v559 = vpop.xlane.xlu0 %558
        %v560 = vmul.f32 %v466, %v367
        %v561 = vmul.f32 %v469, %v367
        %v562 = vmul.f32 %v472, %v367
        %v563 = vmul.f32 %v475, %v367
        %v564 = vmul.f32 %v478, %v367
        %v565 = vmul.f32 %v481, %v367
        %v566 = vmul.f32 %v484, %v367
        %v567 = vmul.f32 %v487, %v367
        %v568 = vmul.f32 %v490, %v367
        %v569 = vmul.f32 %v493, %v367
        %v570 = vmul.f32 %v496, %v367
        %v571 = vmul.f32 %v499, %v367
        %v572 = vmul.f32 %v502, %v367
        %v573 = vmul.f32 %v505, %v367
        %v574 = vmul.f32 %v508, %v367
        %v575 = vmul.f32 %v511, %v367
        %v576 = vmul.f32 %v514, %v367
        %v577 = vmul.f32 %v517, %v367
        %v578 = vmul.f32 %v520, %v367
        %v579 = vmul.f32 %v523, %v367
        %v580 = vmul.f32 %v526, %v367
        %v581 = vmul.f32 %v529, %v367
        %v582 = vmul.f32 %v532, %v367
        %v583 = vmul.f32 %v535, %v367
        %v584 = vmul.f32 %v538, %v367
        %v585 = vmul.f32 %v541, %v367
        %v586 = vmul.f32 %v544, %v367
        %v587 = vmul.f32 %v547, %v367
        %v588 = vmul.f32 %v550, %v367
        %v589 = vmul.f32 %v553, %v367
        %v590 = vmul.f32 %v556, %v367
        %v591 = vmul.f32 %v559, %v367
        %v592 = vadd.f32 %v560, 1e-05
        %v593 = vadd.f32 %v561, 1e-05
        %v594 = vadd.f32 %v562, 1e-05
        %v595 = vadd.f32 %v563, 1e-05
        %v596 = vadd.f32 %v564, 1e-05
        %v597 = vadd.f32 %v565, 1e-05
        %v598 = vadd.f32 %v566, 1e-05
        %v599 = vadd.f32 %v567, 1e-05
        %v600 = vadd.f32 %v568, 1e-05
        %v601 = vadd.f32 %v569, 1e-05
        %v602 = vadd.f32 %v570, 1e-05
        %v603 = vadd.f32 %v571, 1e-05
        %v604 = vadd.f32 %v572, 1e-05
        %v605 = vadd.f32 %v573, 1e-05
        %v606 = vadd.f32 %v574, 1e-05
        %v607 = vadd.f32 %v575, 1e-05
        %v608 = vadd.f32 %v576, 1e-05
        %v609 = vadd.f32 %v577, 1e-05
        %v610 = vadd.f32 %v578, 1e-05
        %v611 = vadd.f32 %v579, 1e-05
        %v612 = vadd.f32 %v580, 1e-05
        %v613 = vadd.f32 %v581, 1e-05
        %v614 = vadd.f32 %v582, 1e-05
        %v615 = vadd.f32 %v583, 1e-05
        %v616 = vadd.f32 %v584, 1e-05
        %v617 = vadd.f32 %v585, 1e-05
        %v618 = vadd.f32 %v586, 1e-05
        %v619 = vadd.f32 %v587, 1e-05
        %v620 = vadd.f32 %v588, 1e-05
        %v621 = vadd.f32 %v589, 1e-05
        %v622 = vadd.f32 %v590, 1e-05
        %v623 = vadd.f32 %v591, 1e-05
        %v624 = vrsqrt.pop %v592
        %v625 = vrsqrt.pop %v593
        %v626 = vrsqrt.pop %v594
        %v627 = vrsqrt.pop %v595
        %v628 = vrsqrt.pop %v596
        %v629 = vrsqrt.pop %v597
        %v630 = vrsqrt.pop %v598
        %v631 = vrsqrt.pop %v599
        %v632 = vrsqrt.pop %v600
        %v633 = vrsqrt.pop %v601
        %v634 = vrsqrt.pop %v602
        %v635 = vrsqrt.pop %v603
        %v636 = vrsqrt.pop %v604
        %v637 = vrsqrt.pop %v605
        %v638 = vrsqrt.pop %v606
        %v639 = vrsqrt.pop %v607
        %v640 = vrsqrt.pop %v608
        %v641 = vrsqrt.pop %v609
        %v642 = vrsqrt.pop %v610
        %v643 = vrsqrt.pop %v611
        %v644 = vrsqrt.pop %v612
        %v645 = vrsqrt.pop %v613
        %v646 = vrsqrt.pop %v614
        %v647 = vrsqrt.pop %v615
        %v648 = vrsqrt.pop %v616
        %v649 = vrsqrt.pop %v617
        %v650 = vrsqrt.pop %v618
        %v651 = vrsqrt.pop %v619
        %v652 = vrsqrt.pop %v620
        %v653 = vrsqrt.pop %v621
        %v654 = vrsqrt.pop %v622
        %v655 = vrsqrt.pop %v623
        %v656 = vmul.f32 %v400, %v624
        %v657 = vmul.f32 %v401, %v625
        %v658 = vmul.f32 %v402, %v626
        %v659 = vmul.f32 %v403, %v627
        %v660 = vmul.f32 %v404, %v628
        %v661 = vmul.f32 %v405, %v629
        %v662 = vmul.f32 %v406, %v630
        %v663 = vmul.f32 %v407, %v631
        %v664 = vmul.f32 %v408, %v632
        %v665 = vmul.f32 %v409, %v633
        %v666 = vmul.f32 %v410, %v634
        %v667 = vmul.f32 %v411, %v635
        %v668 = vmul.f32 %v412, %v636
        %v669 = vmul.f32 %v413, %v637
        %v670 = vmul.f32 %v414, %v638
        %v671 = vmul.f32 %v415, %v639
        %v672 = vmul.f32 %v416, %v640
        %v673 = vmul.f32 %v417, %v641
        %v674 = vmul.f32 %v418, %v642
        %v675 = vmul.f32 %v419, %v643
        %v676 = vmul.f32 %v420, %v644
        %v677 = vmul.f32 %v421, %v645
        %v678 = vmul.f32 %v422, %v646
        %v679 = vmul.f32 %v423, %v647
        %v680 = vmul.f32 %v424, %v648
        %v681 = vmul.f32 %v425, %v649
        %v682 = vmul.f32 %v426, %v650
        %v683 = vmul.f32 %v427, %v651
        %v684 = vmul.f32 %v428, %v652
        %v685 = vmul.f32 %v429, %v653
        %v686 = vmul.f32 %v430, %v654
        %v687 = vmul.f32 %v431, %v655
        %v688 = vld [vmem:[%s1] sm:$0x1]
        %v690 = vlaneseq
        %v691 = vshrl.u32 %v690, 7
        %v692 = vsub.s32 0, %v691
        %v693 = vrot.slane %v688, %v692
        %v695 = vmul.f32 %v656, %v693
        %v696 = vmul.f32 %v657, %v693
        %v697 = vmul.f32 %v658, %v693
        %v698 = vmul.f32 %v659, %v693
        %v699 = vmul.f32 %v660, %v693
        %v700 = vmul.f32 %v661, %v693
        %v701 = vmul.f32 %v662, %v693
        %v702 = vmul.f32 %v663, %v693
        %v703 = vmul.f32 %v664, %v693
        %v704 = vmul.f32 %v665, %v693
        %v705 = vmul.f32 %v666, %v693
        %v706 = vmul.f32 %v667, %v693
        %v707 = vmul.f32 %v668, %v693
        %v708 = vmul.f32 %v669, %v693
        %v709 = vmul.f32 %v670, %v693
        %v710 = vmul.f32 %v671, %v693
        %v711 = vmul.f32 %v672, %v693
        %v712 = vmul.f32 %v673, %v693
        %v713 = vmul.f32 %v674, %v693
        %v714 = vmul.f32 %v675, %v693
        %v715 = vmul.f32 %v676, %v693
        %v716 = vmul.f32 %v677, %v693
        %v717 = vmul.f32 %v678, %v693
        %v718 = vmul.f32 %v679, %v693
        %v719 = vmul.f32 %v680, %v693
        %v720 = vmul.f32 %v681, %v693
        %v721 = vmul.f32 %v682, %v693
        %v722 = vmul.f32 %v683, %v693
        %v723 = vmul.f32 %v684, %v693
        %v724 = vmul.f32 %v685, %v693
        %v725 = vmul.f32 %v686, %v693
        %v726 = vmul.f32 %v687, %v693
        %v727 = vld [vmem:[%s2] sm:$0x1]
        %v729 = vlaneseq
        %v730 = vshrl.u32 %v729, 7
        %v731 = vsub.s32 0, %v730
        %v732 = vrot.slane %v727, %v731
        %v734 = vadd.f32 %v695, %v732
        %v735 = vadd.f32 %v696, %v732
        %v736 = vadd.f32 %v697, %v732
        %v737 = vadd.f32 %v698, %v732
        %v738 = vadd.f32 %v699, %v732
        %v739 = vadd.f32 %v700, %v732
        %v740 = vadd.f32 %v701, %v732
        %v741 = vadd.f32 %v702, %v732
        %v742 = vadd.f32 %v703, %v732
        %v743 = vadd.f32 %v704, %v732
        %v744 = vadd.f32 %v705, %v732
        %v745 = vadd.f32 %v706, %v732
        %v746 = vadd.f32 %v707, %v732
        %v747 = vadd.f32 %v708, %v732
        %v748 = vadd.f32 %v709, %v732
        %v749 = vadd.f32 %v710, %v732
        %v750 = vadd.f32 %v711, %v732
        %v751 = vadd.f32 %v712, %v732
        %v752 = vadd.f32 %v713, %v732
        %v753 = vadd.f32 %v714, %v732
        %v754 = vadd.f32 %v715, %v732
        %v755 = vadd.f32 %v716, %v732
        %v756 = vadd.f32 %v717, %v732
        %v757 = vadd.f32 %v718, %v732
        %v758 = vadd.f32 %v719, %v732
        %v759 = vadd.f32 %v720, %v732
        %v760 = vadd.f32 %v721, %v732
        %v761 = vadd.f32 %v722, %v732
        %v762 = vadd.f32 %v723, %v732
        %v763 = vadd.f32 %v724, %v732
        %v764 = vadd.f32 %v725, %v732
        %v765 = vadd.f32 %v726, %v732
        %v766 = vpack.c.bf16 %v735, %v734
        %v767 = vpack.c.bf16 %v737, %v736
        %v768 = vpack.c.bf16 %v739, %v738
        %v769 = vpack.c.bf16 %v741, %v740
        %v770 = vpack.c.bf16 %v743, %v742
        %v771 = vpack.c.bf16 %v745, %v744
        %v772 = vpack.c.bf16 %v747, %v746
        %v773 = vpack.c.bf16 %v749, %v748
        %v774 = vpack.c.bf16 %v751, %v750
        %v775 = vpack.c.bf16 %v753, %v752
        %v776 = vpack.c.bf16 %v755, %v754
        %v777 = vpack.c.bf16 %v757, %v756
        %v778 = vpack.c.bf16 %v759, %v758
        %v779 = vpack.c.bf16 %v761, %v760
        %v780 = vpack.c.bf16 %v763, %v762
        %v781 = vpack.c.bf16 %v765, %v764
        %v782 = vld [vmem:[%s3] sm:$0x3]
        %v784 = vsel %vm270, %v782, 0
        %v787 = vsel %vm270, %v766, 0
        %v790 = vsel %vm270, %v767, 0
        %v793 = vsel %vm270, %v768, 0
        %v796 = vsel %vm270, %v769, 0
        %v799 = vsel %vm270, %v770, 0
        %v802 = vsel %vm270, %v771, 0
        %v805 = vsel %vm270, %v772, 0
        %v808 = vsel %vm270, %v773, 0
        %v811 = vsel %vm270, %v774, 0
        %v814 = vsel %vm270, %v775, 0
        %v817 = vsel %vm270, %v776, 0
        %v820 = vsel %vm270, %v777, 0
        %v823 = vsel %vm270, %v778, 0
        %v826 = vsel %vm270, %v779, 0
        %v829 = vsel %vm270, %v780, 0
        %v832 = vsel %vm270, %v781, 0
        %834 = vmatprep.subr.bf16.mxu0 0
        %835 = vmatpush1.bf16.xpose.msra.mxu0 %v787
        %836 = vmatprep.subr.bf16.mxu0 0
        %837 = vmatpush1.bf16.xpose.msra.mxu0 %v790
        %838 = vmatprep.subr.bf16.mxu0 0
        %839 = vmatpush1.bf16.xpose.msra.mxu0 %v793
        %840 = vmatprep.subr.bf16.mxu0 0
        %841 = vmatpush1.bf16.xpose.msra.mxu0 %v796
        %842 = vmatprep.subr.bf16.mxu0 0
        %843 = vmatpush1.bf16.xpose.msra.mxu0 %v799
        %844 = vmatprep.subr.bf16.mxu0 0
        %845 = vmatpush1.bf16.xpose.msra.mxu0 %v802
        %846 = vmatprep.subr.bf16.mxu0 0
        %847 = vmatpush1.bf16.xpose.msra.mxu0 %v805
        %848 = vmatprep.subr.bf16.mxu0 0
        %849 = vmatpush1.bf16.xpose.msra.mxu0 %v808
        %850 = vmatprep.subr.bf16.mxu0 0
        %851 = vmatpush1.bf16.xpose.msra.mxu0 %v811
        %852 = vmatprep.subr.bf16.mxu0 0
        %853 = vmatpush1.bf16.xpose.msra.mxu0 %v814
        %854 = vmatprep.subr.bf16.mxu0 0
        %855 = vmatpush1.bf16.xpose.msra.mxu0 %v817
        %856 = vmatprep.subr.bf16.mxu0 0
        %857 = vmatpush1.bf16.xpose.msra.mxu0 %v820
        %858 = vmatprep.subr.bf16.mxu0 0
        %859 = vmatpush1.bf16.xpose.msra.mxu0 %v823
        %860 = vmatprep.subr.bf16.mxu0 0
        %861 = vmatpush1.bf16.xpose.msra.mxu0 %v826
        %862 = vmatprep.subr.bf16.mxu0 0
        %863 = vmatpush1.bf16.xpose.msra.mxu0 %v829
        %864 = vmatprep.subr.bf16.mxu0 0
        %865 = vmatpush1.bf16.xpose.msra.mxu0 %v832
        %866 = vmatprep.mubr.bf16.mxu0 0
        %867 = vmatmul.mubr.bf16.gmra.mrb[0].mxu0 %v784
        %v868 = vpop.f32.mrb[0].mxu0
        %v869 = vadd.f32 0.0, %v868
        %v870 = vpop.f32.mrb[0].mxu0
        %v871 = vadd.f32 0.0, %v870
        %v872 = vpop.f32.mrb[0].mxu0
        %v873 = vpop.f32.mrb[0].mxu0
        %874 = vdwg.mxu0
        %v875 = vpack.c.bf16 %v869, %v869
        %v876 = vpack.c.bf16 %v871, %v871
        %v879 = vcombine.low %v875, %v876
        %v881 = vunpack.c.l.s4 1983009808
        %v882 = vunpack.c.0.s8 %v881
        %v883 = vlaneseq
        %v884 = vshrl.u32 %v883, 7
        %v885 = vsub.s32 %v882, %v884
        %v886 = vrot.slane %v879, %v885
        %888 = vst [vmem:[%s234] sm:$0xf] %v886
        %s889 = sand.u32 %s134, 1
        %s890 = scalar_lea.sflag [#allocation4], %s889
        %s891 = sand.u32 %s134, 1
        %s892 = smul.addr %s891, 4
        %s893 = scalar_lea.vmem [#allocation5], %s892
        // Predicated region
        $region41: #{tpu_custom_call.1} parent=35 // pred_check
          %p894 = pneg %p144
        $region42: #{tpu_custom_call.1} parent=35 // pred_check_branch
          %896 = sbr.rel (%p894) target = $region44
        $region43: #{tpu_custom_call.1} parent=35 // pred_region
          %s897 = smul.u32 2, %s26
          %s899 = ssub.s32 64, 64
          %900 = vsyncadd %s890, %s899
          %s901 = smul.addr %s25, 2
          %s902 = sadd.s32 %s897, %s901
          %s903 = smul.addr %s902, 32
          %s904 = scalar_lea.hbm %s4, %s903
          %s906 = sshll.u32 %s893, 4
          %s907 = int_to_ptr.vmem [resolvable:$true] %s906
          %909 = dma.vmem_to_hbm [thread:$0]  %s907, 64, %s904, %s890
        $region44: #{tpu_custom_call.1} parent=35 // pred_fallthru
          _
      $region36: #{tpu_custom_call.1} parent=5 // pred_fallthru
        _
      %p910 = scmp.le.s32.totalorder 2, %s16
      // Predicated region
      $region45: #{tpu_custom_call.1} parent=5 // pred_check
        %p911 = pneg %p910
      $region46: #{tpu_custom_call.1} parent=5 // pred_check_branch
        %913 = sbr.rel (%p911) target = $region48
      $region47: #{tpu_custom_call.1} parent=5 // pred_region
        %s914 = ssub.s32 %s16, 2
        // Predicated region
        $region49: #{tpu_custom_call.1} parent=47 // pred_check
          %p915 = pneg %p150
        $region50: #{tpu_custom_call.1} parent=47 // pred_check_branch
          %917 = sbr.rel (%p915) target = $region52
        $region51: #{tpu_custom_call.1} parent=47 // pred_region
          %s918 = sand.u32 %s135, 1
          %s919 = scalar_lea.sflag [#allocation4], %s918
          %s920 = sand.u32 %s135, 1
          %s921 = smul.addr %s920, 4
          %s922 = scalar_lea.vmem [#allocation5], %s921
          %923 = dma.done %s919, 64
        $region52: #{tpu_custom_call.1} parent=47 // pred_fallthru
          _
      $region48: #{tpu_custom_call.1} parent=5 // pred_fallthru
        _
    $region6: #{tpu_custom_call.1} parent=1 // loop_footer
      %s20 = sadd.s32 1, %s16
    $region7: #{tpu_custom_call.1} parent=1 // loop_footer_branch
      %15 = sbr.rel target = $region3
    $region8: #{tpu_custom_call.1} parent=1 // loop_exit
      _
    %924 = vsyncpa [#allocation3], 1
    %s925 = scalar_lea.sflag [#allocation3], 1
    %926 = vsyncpa %s925, 1
    %927 = vsyncpa [#allocation4], 1
    %s928 = scalar_lea.sflag [#allocation4], 1
    %929 = vsyncpa %s928, 1

</llo_original>
